<compile_context>
chip_gen: v5e
topology: v5e:2x2
jax: 0.10.0
libtpu: 0.0.40
codegen_flags: <defaults>
</compile_context>

<pallas_src>
import functools

import jax
import jax.numpy as jnp
from jax.experimental import pallas as pl
from jax.experimental.pallas import tpu as pltpu

LANE = 512          # lane width for the reduction kernel
BR_MAX = 256        # rec-sum block rows cap (keeps v5e scoped VMEM happy)
VMEM_BUDGET = 13 * (1 << 20)   # per-conv-call tile budget (< v5e 16 MiB scoped default)


def _round_up(x, m):
    return ((x + m - 1) // m) * m


def _vmem_spec():
    return pl.BlockSpec(memory_space=pltpu.MemorySpace.VMEM)


def _choose_tiles(M, Kp, Np):
    """Adaptive (tm, Mp, tn): small-M layers are not padded to a fixed 256, and the
    parallel grid keeps >=2 blocks when possible so both v7x TensorCores are used."""
    tn = min(Np, 256)
    tm = min(256, _round_up(M, 16))
    Mp = _round_up(M, tm)
    if (Mp // tm) * (Np // tn) < 2 and M >= 32:
        tm = _round_up((M + 1) // 2, 16)
        Mp = _round_up(M, tm)

    def est(tm_, tn_):
        # x (2 buf, bf16) + w (2 buf, bf16, full-K resident) + out (2 buf, <=4B)
        return 2 * tm_ * Kp * 2 + 2 * Kp * tn_ * 2 + 2 * tm_ * tn_ * 4

    while est(tm, tn) > VMEM_BUDGET and tm > 16:
        tm = max(16, tm // 2)
        Mp = _round_up(M, tm)
    while est(tm, tn) > VMEM_BUDGET and tn > 128:
        tn = max(128, tn // 2)
    return tm, Mp, tn


# --------------------------- Pallas kernels ---------------------------

def _matmul_bias_act_kernel(x_ref, w_ref, b_ref, o_ref, *, use_act):
    # x: (tm, Kp) bf16, w: (Kp, tn) bf16 (resident across M tiles), b: (1, tn) f32
    y = jnp.dot(x_ref[...], w_ref[...], preferred_element_type=jnp.float32)
    y = y + b_ref[...]
    if use_act:
        y = jnp.where(y > 0, y, 0.2 * y)           # LeakyReLU(0.2)
    o_ref[...] = y.astype(o_ref.dtype)


def conv_matmul_bias_act(x, w, b, *, use_act, out_dtype, tm, tn):
    Mp, Kp = x.shape
    _, Np = w.shape
    nb, mb = Np // tn, Mp // tm
    cost = pl.CostEstimate(
        flops=2 * Mp * Np * Kp, transcendentals=0,
        bytes_accessed=Mp * Kp * 2 + Kp * Np * 2
        + Mp * Np * jnp.dtype(out_dtype).itemsize)
    return pl.pallas_call(
        functools.partial(_matmul_bias_act_kernel, use_act=use_act),
        out_shape=jax.ShapeDtypeStruct((Mp, Np), out_dtype),
        grid_spec=pltpu.PrefetchScalarGridSpec(
            num_scalar_prefetch=0,
            grid=(nb, mb),                                        # N outer, M inner
            in_specs=[pl.BlockSpec((tm, Kp), lambda j, i: (i, 0)),
                      pl.BlockSpec((Kp, tn), lambda j, i: (0, j)),  # weight resident
                      pl.BlockSpec((1, tn), lambda j, i: (0, j))],
            out_specs=pl.BlockSpec((tm, tn), lambda j, i: (i, j))),
        compiler_params=pltpu.CompilerParams(
            dimension_semantics=("parallel", "parallel")),
        cost_estimate=cost,
    )(x, w, b)


def _matmul_bn_stats_kernel(x_ref, w_ref, o_ref, psum_ref, psumsq_ref):
    # Fused: matmul + bf16 store + per-tile column sum/sumsq from the f32 accumulator
    # (no separate full re-read of the conv output for batch stats).
    y = jnp.dot(x_ref[...], w_ref[...], preferred_element_type=jnp.float32)
    o_ref[...] = y.astype(o_ref.dtype)
    s = jnp.sum(y, axis=0, keepdims=True)           # (1, tn) f32
    ss = jnp.sum(y * y, axis=0, keepdims=True)
    psum_ref[...] = jnp.broadcast_to(s[None, :, :], psum_ref.shape)
    psumsq_ref[...] = jnp.broadcast_to(ss[None, :, :], psumsq_ref.shape)


def conv_matmul_bn(x, w, *, tm, tn):
    Mp, Kp = x.shape
    _, Np = w.shape
    nb, mb = Np // tn, Mp // tm
    cost = pl.CostEstimate(
        flops=2 * Mp * Np * Kp + 3 * Mp * Np, transcendentals=0,
        bytes_accessed=Mp * Kp * 2 + Kp * Np * 2 + Mp * Np * 2 + 2 * mb * 8 * Np * 4)
    return pl.pallas_call(
        _matmul_bn_stats_kernel,
        out_shape=(jax.ShapeDtypeStruct((Mp, Np), jnp.bfloat16),
                   jax.ShapeDtypeStruct((mb, 8, Np), jnp.float32),
                   jax.ShapeDtypeStruct((mb, 8, Np), jnp.float32)),
        grid_spec=pltpu.PrefetchScalarGridSpec(
            num_scalar_prefetch=0,
            grid=(nb, mb),
            in_specs=[pl.BlockSpec((tm, Kp), lambda j, i: (i, 0)),
                      pl.BlockSpec((Kp, tn), lambda j, i: (0, j))],   # no bias DMA
            out_specs=(pl.BlockSpec((tm, tn), lambda j, i: (i, j)),
                       pl.BlockSpec((1, 8, tn), lambda j, i: (i, 0, j)),
                       pl.BlockSpec((1, 8, tn), lambda j, i: (i, 0, j)))),
        compiler_params=pltpu.CompilerParams(
            dimension_semantics=("parallel", "parallel")),
        cost_estimate=cost,
    )(x, w)


def _scale_shift_act_kernel(y_ref, s_ref, t_ref, o_ref):
    y = y_ref[...].astype(jnp.float32) * s_ref[...] + t_ref[...]
    o_ref[...] = jnp.where(y > 0, y, 0.2 * y).astype(o_ref.dtype)


def scale_shift_act(y, scale, shift, *, tm, tn):
    Mp, Np = y.shape
    return pl.pallas_call(
        _scale_shift_act_kernel,
        out_shape=jax.ShapeDtypeStruct((Mp, Np), jnp.bfloat16),
        grid_spec=pltpu.PrefetchScalarGridSpec(
            num_scalar_prefetch=0,
            grid=(Np // tn, Mp // tm),
            in_specs=[pl.BlockSpec((tm, tn), lambda j, i: (i, j)),
                      pl.BlockSpec((1, tn), lambda j, i: (0, j)),
                      pl.BlockSpec((1, tn), lambda j, i: (0, j))],
            out_specs=pl.BlockSpec((tm, tn), lambda j, i: (i, j))),
        compiler_params=pltpu.CompilerParams(
            dimension_semantics=("parallel", "parallel")),
    )(y, scale, shift)


def _rec_sum_kernel(in0_ref, rec0_ref, in1_ref, rec1_ref, o_ref, acc_ref, *,
                    range_w, intensity_w):
    # Elementwise accumulate into a VMEM scratch (pure VPU); single cross-lane reduce
    # + (1,1) store only at the final grid step.
    @pl.when(pl.program_id(0) == 0)
    def _():
        acc_ref[...] = jnp.zeros_like(acc_ref)

    acc_ref[...] += (range_w * jnp.abs(in0_ref[...] - rec0_ref[...])
                     + intensity_w * jnp.abs(in1_ref[...] - rec1_ref[...]))

    @pl.when(pl.program_id(0) == pl.num_programs(0) - 1)
    def _():
        o_ref[...] = jnp.sum(acc_ref[...], keepdims=True)


def rec_sum_pallas(in0, rec0, in1, rec1, range_w, intensity_w):
    """Sum over all elements of range_w*|in0-rec0| + intensity_w*|in1-rec1|."""
    T = in0.shape[0]
    rows = -(-T // LANE)
    if rows <= BR_MAX:
        rows_pad = _round_up(rows, 8)
        br = rows_pad
    else:
        rows_pad = _round_up(rows, BR_MAX)
        br = BR_MAX

    def prep(a):
        a = jnp.pad(a.astype(jnp.float32), (0, rows_pad * LANE - T))
        return a.reshape(rows_pad, LANE)

    planes = [prep(a) for a in (in0, rec0, in1, rec1)]
    kernel = functools.partial(_rec_sum_kernel, range_w=float(range_w),
                               intensity_w=float(intensity_w))
    out = pl.pallas_call(
        kernel,
        out_shape=jax.ShapeDtypeStruct((1, 1), jnp.float32),
        grid_spec=pltpu.PrefetchScalarGridSpec(
            num_scalar_prefetch=0,
            grid=(rows_pad // br,),
            in_specs=[pl.BlockSpec((br, LANE), lambda i: (i, 0))] * 4,
            out_specs=pl.BlockSpec((1, 1), lambda i: (0, 0)),
            scratch_shapes=[pltpu.VMEM((br, LANE), jnp.float32)]),
        compiler_params=pltpu.CompilerParams(dimension_semantics=("arbitrary",)),
    )(*planes)
    return out[0, 0]


def _hinge_kernel(real_ref, fake_ref, o_ref):
    loss_real = jnp.mean(jnp.maximum(1.0 - real_ref[...], 0.0), keepdims=True)
    loss_fake = jnp.mean(jnp.maximum(1.0 + fake_ref[...], 0.0), keepdims=True)
    o_ref[...] = 0.5 * (loss_real + loss_fake)


def hinge_d_loss_pallas(logits_real_2d, logits_fake_2d):
    out = pl.pallas_call(
        _hinge_kernel,
        out_shape=jax.ShapeDtypeStruct((1, 1), jnp.float32),
        in_specs=[_vmem_spec()] * 2,
        out_specs=_vmem_spec(),
    )(logits_real_2d, logits_fake_2d)
    return out[0, 0]


def _neg_mean_kernel(x_ref, o_ref):
    o_ref[...] = -jnp.mean(x_ref[...], keepdims=True)


def neg_mean_pallas(x2d):
    out = pl.pallas_call(
        _neg_mean_kernel,
        out_shape=jax.ShapeDtypeStruct((1, 1), jnp.float32),
        in_specs=[_vmem_spec()],
        out_specs=_vmem_spec(),
    )(x2d)
    return out[0, 0]


# ------------------------------ JAX glue ------------------------------

def im2col_nhwc(x, k, stride, pad):
    """x: (B, H, W, C) -> ((B*Ho*Wo, k*k*C), Ho, Wo); K-order = (kh, kw, cin)."""
    # TODO(synk): an implicit-GEMM x-side (shifted-window DMA reads inside the matmul
    # pipeline) would avoid the 16x im2col HBM amplification on the stride-1 layers;
    # kept XLA-side for robustness.
    B, H, W, C = x.shape
    xp = jnp.pad(x, ((0, 0), (pad, pad), (pad, pad), (0, 0)))
    Hp, Wp = H + 2 * pad, W + 2 * pad
    Ho = (Hp - k) // stride + 1
    Wo = (Wp - k) // stride + 1
    patches = [xp[:, i:i + stride * Ho:stride, j:j + stride * Wo:stride, :]
               for i in range(k) for j in range(k)]
    cols = jnp.concatenate(patches, axis=-1)                   # (B, Ho, Wo, k*k*C)
    return cols.reshape(B * Ho * Wo, k * k * C), Ho, Wo


class NLayerDiscriminatorPallas:
    """PatchGAN discriminator (taming NLayerDiscriminator), conv hot path in Pallas."""

    def __init__(self, key, input_nc=3, ndf=64, n_layers=3):
        # (in_c, out_c, stride, use_bn, use_act)
        cfgs = [(input_nc, ndf, 2, False, True)]
        nf_mult = 1
        for n in range(1, n_layers):
            prev, nf_mult = nf_mult, min(2 ** n, 8)
            cfgs.append((ndf * prev, ndf * nf_mult, 2, True, True))
        prev, nf_mult = nf_mult, min(2 ** n_layers, 8)
        cfgs.append((ndf * prev, ndf * nf_mult, 1, True, True))
        cfgs.append((ndf * nf_mult, 1, 1, False, False))

        self.layers = []
        for (cin, cout, stride, use_bn, use_act) in cfgs:
            key, kw_, kg_ = jax.random.split(key, 3)
            # weights_init: conv ~ N(0, 0.02); BN weight ~ N(1, 0.02), BN bias 0
            w = 0.02 * jax.random.normal(kw_, (cout, cin, 4, 4), jnp.float32)
            cin_pad = _round_up(cin, 8)          # K = 16*cin_pad is lane-aligned
            K = 16 * cin_pad
            Np = _round_up(cout, 128)
            w = jnp.pad(w, ((0, 0), (0, cin_pad - cin), (0, 0), (0, 0)))
            # (kh, kw, cin, cout) K-order to match im2col_nhwc; pad N, cast to bf16.
            w_mat = jnp.transpose(w, (2, 3, 1, 0)).reshape(K, cout)
            w_pad = jnp.pad(w_mat, ((0, 0), (0, Np - cout))).astype(jnp.bfloat16)
            # TODO(synk): PyTorch leaves the Conv default (non-zero) bias init on the
            # bias=True convs; zero-init here (parity-only, both are random inits).
            b_pad = jnp.zeros((1, Np), jnp.float32)
            if use_bn:
                gamma = 1.0 + 0.02 * jax.random.normal(kg_, (cout,), jnp.float32)
            else:
                gamma = jnp.ones((cout,), jnp.float32)
            g_pad = jnp.pad(gamma.reshape(1, cout), ((0, 0), (0, Np - cout)))
            beta_pad = jnp.zeros((1, Np), jnp.float32)
            self.layers.append(dict(w=w_pad, b=b_pad, gamma=g_pad, beta=beta_pad,
                                    stride=stride, use_bn=use_bn, use_act=use_act,
                                    cin_pad=cin_pad, cout=cout))

    def __call__(self, x_nchw):
        # Single boundary transpose; activations stay NHWC bf16 between layers.
        h = jnp.transpose(x_nchw, (0, 2, 3, 1)).astype(jnp.bfloat16)
        for layer in self.layers:
            B = h.shape[0]
            cpad = layer['cin_pad'] - h.shape[-1]
            if cpad:
                h = jnp.pad(h, ((0, 0), (0, 0), (0, 0), (0, cpad)))
            cols, Ho, Wo = im2col_nhwc(h, 4, layer['stride'], 1)   # (M, Kp) bf16
            M, _ = cols.shape
            Kp, Np = layer['w'].shape
            tm, Mp, tn = _choose_tiles(M, Kp, Np)
            if Mp > M:
                cols = jnp.pad(cols, ((0, Mp - M), (0, 0)))

            if layer['use_bn']:
                # matmul + fused f32-accumulator batch stats, bf16 conv output
                # (conv bias dropped: cancelled by train-mode BN; PyTorch bias=False)
                y, ps, pss = conv_matmul_bn(cols, layer['w'], tm=tm, tn=tn)
                s = jnp.sum(ps[:, 0, :], axis=0)                   # (Np,) exact (pad rows = 0)
                ss = jnp.sum(pss[:, 0, :], axis=0)
                mean = s / M
                var = jnp.maximum(ss / M - mean * mean, 0.0)
                scale = layer['gamma'] * jax.lax.rsqrt(var + 1e-5)
                shift = layer['beta'] - mean * scale
                # tiled BN + LeakyReLU epilogue, bf16 in / bf16 out
                y = scale_shift_act(y, scale, shift, tm=tm, tn=tn)
            else:
                # TODO(synk): the final cout=1 conv is padded to 128 MXU columns; a
                # streaming VPU dot would avoid the padded-column work/writes.
                out_dtype = jnp.bfloat16 if layer['use_act'] else jnp.float32
                y = conv_matmul_bias_act(cols, layer['w'], layer['b'],
                                         use_act=layer['use_act'],
                                         out_dtype=out_dtype, tm=tm, tn=tn)
            h = y[:M, :layer['cout']].reshape(B, Ho, Wo, layer['cout'])
        return jnp.transpose(h, (0, 3, 1, 2)).astype(jnp.float32)   # (B,1,Ho,Wo) NCHW


class _RangeImageStub:
    # stand-in for point_cloud_to_range_image_M3ED: only .log / .inverse used here
    log = False
    inverse = False


def adopt_weight(weight, global_step, threshold=0, value=0.0):
    if global_step < threshold:
        weight = value
    return weight


class GeneralLPIPSWithDiscriminatorPallas:
    def __init__(self, disc_start, logvar_init=0.0, pixelloss_weight=1.0,
                 disc_num_layers=3, disc_in_channels=3, disc_factor=1.0,
                 disc_weight=1.0, perceptual_weight=0.0, intensity_weight=10.0,
                 used_feature=2, range_weight=40.0, regularization_weights=None,
                 disc_ndf=64, wo_perceptual=True, seed=0):
        assert wo_perceptual and perceptual_weight == 0.0
        # TODO(synk): LPIPS perceptual loss needs a pretrained VGG; omitted via the
        # module's own wo_perceptual=True / perceptual_weight=0 configuration.
        self.pixel_weight = pixelloss_weight
        self.logvar = jnp.array(logvar_init, jnp.float32)
        self.discriminator_iter_start = disc_start
        self.disc_factor = disc_factor
        self.discriminator_weight = disc_weight
        self.perceptual_weight = perceptual_weight
        self.regularization_weights = regularization_weights or {}
        self.intensity_weight = intensity_weight
        self.used_feature = used_feature
        self.range_weight = range_weight
        self.to_range_image = _RangeImageStub()
        self.discriminator = NLayerDiscriminatorPallas(
            jax.random.PRNGKey(seed), input_nc=disc_in_channels,
            ndf=disc_ndf, n_layers=disc_num_layers)

    def forward(self, regularization_log, inputs, reconstructions, optimizer_idx,
                global_step, last_layer=None, split='train', weights=None):
        B, C, H, W = inputs.shape
        in0 = inputs[:, 0].reshape(-1)
        rec0 = reconstructions[:, 0].reshape(-1)
        if self.used_feature > 1:
            in1 = inputs[:, 1].reshape(-1)
            rec1 = reconstructions[:, 1].reshape(-1)
            iw = self.intensity_weight
        else:
            in1, rec1, iw = jnp.zeros_like(in0), jnp.zeros_like(rec0), 0.0

        numel = B * H * W
        rec_sum = rec_sum_pallas(in0, rec0, in1, rec1, self.range_weight, iw)
        rec_loss_mean = rec_sum / numel
        # nll = rec * exp(-logvar) + logvar  (elementwise)  ->  exact scalar algebra:
        nll_sum = rec_sum * jnp.exp(-self.logvar) + self.logvar * numel
        nll_loss = nll_sum / B
        if weights is not None:
            # TODO(synk): elementwise `weights` not supported; scalar weights only.
            weighted_nll_loss = weights * nll_sum / B
        else:
            weighted_nll_loss = nll_loss

        if optimizer_idx == 0:
            logits_fake = self.discriminator(reconstructions)
            g_loss = neg_mean_pallas(logits_fake.reshape(logits_fake.shape[0], -1))
            # TODO(synk): adaptive d_weight requires autograd through the decoder's
            # last layer (torch.autograd.grad); using the eval-mode fallback (0.0).
            d_weight = jnp.array(0.0, jnp.float32)
            disc_factor = adopt_weight(self.disc_factor, global_step,
                                       threshold=self.discriminator_iter_start)
            loss = weighted_nll_loss + d_weight * disc_factor * g_loss
            log = {}
            for k, v in regularization_log.items():
                if k in self.regularization_weights:
                    loss = loss + self.regularization_weights[k] * v
                log[f'{split}/{k}'] = jnp.mean(v)
            log.update({
                f'{split}/total_loss': loss,
                f'{split}/logvar': self.logvar,
                f'{split}/nll_loss': nll_loss,
                f'{split}/rec_loss': rec_loss_mean,
                f'{split}/d_weight': d_weight,
                f'{split}/disc_factor': jnp.array(disc_factor, jnp.float32),
                f'{split}/g_loss': g_loss,
            })
            return loss, log

        if optimizer_idx == 1:
            logits_real = self.discriminator(jax.lax.stop_gradient(inputs))
            logits_fake = self.discriminator(jax.lax.stop_gradient(reconstructions))
            disc_factor = adopt_weight(self.disc_factor, global_step,
                                       threshold=self.discriminator_iter_start)
            Br = logits_real.shape[0]
            d_loss = disc_factor * hinge_d_loss_pallas(
                logits_real.reshape(Br, -1), logits_fake.reshape(Br, -1))
            log = {
                f'{split}/disc_loss': d_loss,
                f'{split}/logits_real': jnp.mean(logits_real),
                f'{split}/logits_fake': jnp.mean(logits_fake),
            }
            return d_loss, log


if __name__ == "__main__":
    key = jax.random.PRNGKey(0)
    k1, k2, k3 = jax.random.split(key, 3)
    B, C, H, W = 2, 3, 32, 32          # spatial=32 so the k=4 PatchGAN stack is valid
    inputs = jax.random.uniform(k1, (B, C, H, W), jnp.float32)
    reconstructions = jax.random.uniform(k2, (B, C, H, W), jnp.float32)
    reg_log = {"kl_loss": jnp.square(jax.random.normal(k3, (B,), jnp.float32))}

    mod = GeneralLPIPSWithDiscriminatorPallas(disc_start=100, seed=0)

    loss_g, log_g = mod.forward(reg_log, inputs, reconstructions,
                                optimizer_idx=0, global_step=200)
    loss_d, log_d = mod.forward(reg_log, inputs, reconstructions,
                                optimizer_idx=1, global_step=200)
    jax.block_until_ready((loss_g, log_g, loss_d, log_d))
    print("KERNEL_OK")
</pallas_src>

<mosaic_0001>
module attributes {stable_mosaic.version = 11 : i64} {
  func.func @_rec_sum_kernel(%arg0: i32, %arg1: memref<8x512xf32, #tpu.memory_space<vmem>>, %arg2: memref<8x512xf32, #tpu.memory_space<vmem>>, %arg3: memref<8x512xf32, #tpu.memory_space<vmem>>, %arg4: memref<8x512xf32, #tpu.memory_space<vmem>>, %arg5: memref<1x1xf32, #tpu.memory_space<vmem>>, %arg6: memref<8x512xf32, #tpu.memory_space<vmem>>) attributes {dimension_semantics = [#tpu.dimension_semantics<arbitrary>], iteration_bounds = array<i64: 1>, scalar_prefetch = 0 : i64, scratch_operands = 1 : i64, tpu.core_type = #tpu.core_type<tc>, window_params = [{transform_indices = @transform_0, window_bounds = array<i64: 8, 512>}, {transform_indices = @transform_1, window_bounds = array<i64: 8, 512>}, {transform_indices = @transform_2, window_bounds = array<i64: 8, 512>}, {transform_indices = @transform_3, window_bounds = array<i64: 8, 512>}, {pipeline_mode = #tpu.pipeline_mode<synchronous>, transform_indices = @transform_4, window_bounds = array<i64: 1, 1>}]} {
    %c0_i32 = arith.constant 0 : i32
    %0 = arith.cmpi eq, %arg0, %c0_i32 : i32
    %1 = arith.extui %0 : i1 to i32
    %c0_i32_0 = arith.constant 0 : i32
    %2 = arith.cmpi ne, %1, %c0_i32_0 : i32
    scf.if %2 {
      %cst_15 = arith.constant 0.000000e+00 : f32
      %22 = vector.broadcast %cst_15 : f32 to vector<8x512xf32>
      %c0_16 = arith.constant 0 : index
      %c0_17 = arith.constant 0 : index
      %23 = vector.load %arg6[%c0_16, %c0_17] : memref<8x512xf32, #tpu.memory_space<vmem>>, vector<8x512xf32>
      tpu.vector_store %arg6[%c0_16, %c0_17], %22 {strides = array<i32>} : memref<8x512xf32, #tpu.memory_space<vmem>>, vector<8x512xf32>,
    } else {
    }
    %c0 = arith.constant 0 : index
    %c0_1 = arith.constant 0 : index
    %3 = vector.load %arg6[%c0, %c0_1] : memref<8x512xf32, #tpu.memory_space<vmem>>, vector<8x512xf32>
    %c0_2 = arith.constant 0 : index
    %c0_3 = arith.constant 0 : index
    %4 = vector.load %arg1[%c0_2, %c0_3] : memref<8x512xf32, #tpu.memory_space<vmem>>, vector<8x512xf32>
    %c0_4 = arith.constant 0 : index
    %c0_5 = arith.constant 0 : index
    %5 = vector.load %arg2[%c0_4, %c0_5] : memref<8x512xf32, #tpu.memory_space<vmem>>, vector<8x512xf32>
    %6 = arith.subf %4, %5 : vector<8x512xf32>
    %7 = math.absf %6 : vector<8x512xf32>
    %cst = arith.constant 4.000000e+01 : f32
    %8 = vector.broadcast %cst : f32 to vector<8x512xf32>
    %9 = arith.mulf %8, %7 : vector<8x512xf32>
    %c0_6 = arith.constant 0 : index
    %c0_7 = arith.constant 0 : index
    %10 = vector.load %arg3[%c0_6, %c0_7] : memref<8x512xf32, #tpu.memory_space<vmem>>, vector<8x512xf32>
    %c0_8 = arith.constant 0 : index
    %c0_9 = arith.constant 0 : index
    %11 = vector.load %arg4[%c0_8, %c0_9] : memref<8x512xf32, #tpu.memory_space<vmem>>, vector<8x512xf32>
    %12 = arith.subf %10, %11 : vector<8x512xf32>
    %13 = math.absf %12 : vector<8x512xf32>
    %cst_10 = arith.constant 1.000000e+01 : f32
    %14 = vector.broadcast %cst_10 : f32 to vector<8x512xf32>
    %15 = arith.mulf %14, %13 : vector<8x512xf32>
    %16 = arith.addf %9, %15 : vector<8x512xf32>
    %17 = arith.addf %3, %16 : vector<8x512xf32>
    %c0_11 = arith.constant 0 : index
    %c0_12 = arith.constant 0 : index
    %18 = vector.load %arg6[%c0_11, %c0_12] : memref<8x512xf32, #tpu.memory_space<vmem>>, vector<8x512xf32>
    tpu.vector_store %arg6[%c0_11, %c0_12], %17 {strides = array<i32>} : memref<8x512xf32, #tpu.memory_space<vmem>>, vector<8x512xf32>,
    %c0_i32_13 = arith.constant 0 : i32
    %19 = arith.cmpi eq, %arg0, %c0_i32_13 : i32
    %20 = arith.extui %19 : i1 to i32
    %c0_i32_14 = arith.constant 0 : i32
    %21 = arith.cmpi ne, %20, %c0_i32_14 : i32
    scf.if %21 {
      %c0_15 = arith.constant 0 : index
      %c0_16 = arith.constant 0 : index
      %22 = vector.load %arg6[%c0_15, %c0_16] : memref<8x512xf32, #tpu.memory_space<vmem>>, vector<8x512xf32>
      %23 = vector.shape_cast %22 : vector<8x512xf32> to vector<1x8x512xf32>
      %cst_17 = arith.constant dense<0.000000e+00> : vector<1xf32>
      %24 = vector.multi_reduction <add>, %23, %cst_17 [1, 2] : vector<1x8x512xf32> to vector<1xf32>
      %25 = vector.shape_cast %24 : vector<1xf32> to vector<1x1x1xf32>
      %26 = vector.extract %25[0, 0, 0] : f32 from vector<1x1x1xf32>
      %27 = vector.broadcast %26 : f32 to vector<1x1xf32>
      %c0_18 = arith.constant 0 : index
      %c0_19 = arith.constant 0 : index
      %28 = vector.load %arg5[%c0_18, %c0_19] : memref<1x1xf32, #tpu.memory_space<vmem>>, vector<1x1xf32>
      tpu.vector_store %arg5[%c0_18, %c0_19], %27 {strides = array<i32>} : memref<1x1xf32, #tpu.memory_space<vmem>>, vector<1x1xf32>,
    } else {
    }
    return
  }
  func.func @transform_0(%arg0: i32) -> (i32, i32) {
    %c0_i32 = arith.constant 0 : i32
    %c0_i32_0 = arith.constant 0 : i32
    return %arg0, %c0_i32 : i32, i32
  }
  func.func @transform_1(%arg0: i32) -> (i32, i32) {
    %c0_i32 = arith.constant 0 : i32
    %c0_i32_0 = arith.constant 0 : i32
    return %arg0, %c0_i32 : i32, i32
  }
  func.func @transform_2(%arg0: i32) -> (i32, i32) {
    %c0_i32 = arith.constant 0 : i32
    %c0_i32_0 = arith.constant 0 : i32
    return %arg0, %c0_i32 : i32, i32
  }
  func.func @transform_3(%arg0: i32) -> (i32, i32) {
    %c0_i32 = arith.constant 0 : i32
    %c0_i32_0 = arith.constant 0 : i32
    return %arg0, %c0_i32 : i32, i32
  }
  func.func @transform_4(%arg0: i32) -> (i32, i32) {
    %c0_i32 = arith.constant 0 : i32
    %c0_i32_0 = arith.constant 0 : i32
    %c0_i32_1 = arith.constant 0 : i32
    return %c0_i32, %c0_i32_0 : i32, i32
  }
}

</mosaic_0001>

<llo_original>
// kernel: tpu_custom_call.1
$region0: #{tpu_custom_call.1}
  #allocation0 [shape = 'u32[]', space=smem, size = 0x4, offset = 0x4, fixed_abs, tag = 'smem constant byte address 0x4 - core index']
  #allocation1 [shape = 'u32[72,128]{1,0:T(1,128)}', space=vmem, size = 0x9000, scoped, tag = 'internal scratch']
  #allocation2 [shape = 'f32[8,512]{1,0:T(8,128)}', space=vmem, size = 0x4000, scoped, tag = 'scratch operand']
  %s0 = inlined_call_operand.hbm [shape: f32[8,512], index: 0, kind: input, shape index: {}]
  %s1 = inlined_call_operand.hbm [shape: f32[8,512], index: 1, kind: input, shape index: {}]
  %s2 = inlined_call_operand.hbm [shape: f32[8,512], index: 2, kind: input, shape index: {}]
  %s3 = inlined_call_operand.hbm [shape: f32[8,512], index: 3, kind: input, shape index: {}]
  %s4 = inlined_call_operand.hbm [shape: f32[1,1], index: 4, kind: output, shape index: {}]
  %s5 = sld [smem:[#allocation0]]
  $region50: #{tpu_custom_call.1} parent=0
    _
  %s7 = ssub.s32 1, %s5
  %s8 = scalar_select 0, %s7, %s5
  $region1: #{tpu_custom_call.1} parent=0
    #allocation3 [shape = 'u8[16384]{0}', space=vmem, size = 0x4000, scoped, tag = 'input window, operand 0, single buffered']
    #allocation4 [shape = 's32[1]{0}', space=sflag, size = 0x4, scoped, tag = 'scoped memory for tpu_custom_call.1']
    #allocation5 [shape = 's32[1]{0}', space=sflag, size = 0x4, scoped, tag = 'scoped memory for tpu_custom_call.1']
    #allocation6 [shape = 'u8[16384]{0}', space=vmem, size = 0x4000, scoped, tag = 'input window, operand 1, single buffered']
    #allocation7 [shape = 's32[1]{0}', space=sflag, size = 0x4, scoped, tag = 'scoped memory for tpu_custom_call.1']
    #allocation8 [shape = 'u8[16384]{0}', space=vmem, size = 0x4000, scoped, tag = 'input window, operand 2, single buffered']
    #allocation9 [shape = 'u8[16384]{0}', space=vmem, size = 0x4000, scoped, tag = 'input window, operand 3, single buffered']
    #allocation10 [shape = 's32[1]{0}', space=sflag, size = 0x4, scoped, tag = 'scoped memory for tpu_custom_call.1']
    #allocation11 [shape = 'u8[512]{0}', space=vmem, size = 0x400, scoped, tag = 'output window, operand 0, single buffered']
    %9 = vsyncpa [#allocation4], 0
    %10 = vsyncpa [#allocation7], 0
    %11 = vsyncpa [#allocation10], 0
    %12 = vsyncpa [#allocation5], 0
    // Predicated region
    $region2: #{tpu_custom_call.1} parent=1 // pred_check
      _
    $region3: #{tpu_custom_call.1} parent=1 // pred_check_branch
      %14 = sbr.rel (0) target = $region5
    $region4: #{tpu_custom_call.1} parent=1 // pred_region
      %16 = vsyncadd [#allocation4], 0
      %s18 = sshll.u32 %s0, 4
      %s19 = int_to_ptr.hbm [resolvable:$true] %s18
      %s20 = sshll.u32 [#allocation3], 4
      %s21 = int_to_ptr.vmem [resolvable:$true] %s20
      %23 = dma.hbm_to_vmem [thread:$0]  %s19, 512, %s21, [#allocation4]
    $region5: #{tpu_custom_call.1} parent=1 // pred_fallthru
      _
    // Predicated region
    $region6: #{tpu_custom_call.1} parent=1 // pred_check
      _
    $region7: #{tpu_custom_call.1} parent=1 // pred_check_branch
      %25 = sbr.rel (0) target = $region9
    $region8: #{tpu_custom_call.1} parent=1 // pred_region
      %27 = vsyncadd [#allocation7], 0
      %s29 = sshll.u32 %s1, 4
      %s30 = int_to_ptr.hbm [resolvable:$true] %s29
      %s31 = sshll.u32 [#allocation6], 4
      %s32 = int_to_ptr.vmem [resolvable:$true] %s31
      %34 = dma.hbm_to_vmem [thread:$0]  %s30, 512, %s32, [#allocation7]
    $region9: #{tpu_custom_call.1} parent=1 // pred_fallthru
      _
    // Predicated region
    $region10: #{tpu_custom_call.1} parent=1 // pred_check
      _
    $region11: #{tpu_custom_call.1} parent=1 // pred_check_branch
      %36 = sbr.rel (0) target = $region13
    $region12: #{tpu_custom_call.1} parent=1 // pred_region
      %38 = vsyncadd [#allocation7], 0
      %s40 = sshll.u32 %s2, 4
      %s41 = int_to_ptr.hbm [resolvable:$true] %s40
      %s42 = sshll.u32 [#allocation8], 4
      %s43 = int_to_ptr.vmem [resolvable:$true] %s42
      %45 = dma.hbm_to_vmem [thread:$0]  %s41, 512, %s43, [#allocation7]
    $region13: #{tpu_custom_call.1} parent=1 // pred_fallthru
      _
    // Predicated region
    $region14: #{tpu_custom_call.1} parent=1 // pred_check
      _
    $region15: #{tpu_custom_call.1} parent=1 // pred_check_branch
      %47 = sbr.rel (0) target = $region17
    $region16: #{tpu_custom_call.1} parent=1 // pred_region
      %49 = vsyncadd [#allocation10], 0
      %s51 = sshll.u32 %s3, 4
      %s52 = int_to_ptr.hbm [resolvable:$true] %s51
      %s53 = sshll.u32 [#allocation9], 4
      %s54 = int_to_ptr.vmem [resolvable:$true] %s53
      %56 = dma.hbm_to_vmem [thread:$0]  %s52, 512, %s54, [#allocation10]
    $region17: #{tpu_custom_call.1} parent=1 // pred_fallthru
      _
    // Predicated region
    $region18: #{tpu_custom_call.1} parent=1 // pred_check
      _
    $region19: #{tpu_custom_call.1} parent=1 // pred_check_branch
      %58 = sbr.rel (0) target = $region21
    $region20: #{tpu_custom_call.1} parent=1 // pred_region
      %60 = dma.done [#allocation4], 512
    $region21: #{tpu_custom_call.1} parent=1 // pred_fallthru
      _
    // Predicated region
    $region22: #{tpu_custom_call.1} parent=1 // pred_check
      _
    $region23: #{tpu_custom_call.1} parent=1 // pred_check_branch
      %62 = sbr.rel (0) target = $region25
    $region24: #{tpu_custom_call.1} parent=1 // pred_region
      %64 = dma.done [#allocation7], 512
    $region25: #{tpu_custom_call.1} parent=1 // pred_fallthru
      _
    // Predicated region
    $region26: #{tpu_custom_call.1} parent=1 // pred_check
      _
    $region27: #{tpu_custom_call.1} parent=1 // pred_check_branch
      %66 = sbr.rel (0) target = $region29
    $region28: #{tpu_custom_call.1} parent=1 // pred_region
      %68 = dma.done [#allocation7], 512
    $region29: #{tpu_custom_call.1} parent=1 // pred_fallthru
      _
    // Predicated region
    $region30: #{tpu_custom_call.1} parent=1 // pred_check
      _
    $region31: #{tpu_custom_call.1} parent=1 // pred_check_branch
      %70 = sbr.rel (0) target = $region33
    $region32: #{tpu_custom_call.1} parent=1 // pred_region
      %72 = dma.done [#allocation10], 512
    $region33: #{tpu_custom_call.1} parent=1 // pred_fallthru
      _
    %p73 = scmp.eq.s32.totalorder 0, 0
    // Predicated region
    $region34: #{tpu_custom_call.1} parent=1 // pred_check
      %p74 = pneg %p73
    $region35: #{tpu_custom_call.1} parent=1 // pred_check_branch
      %76 = sbr.rel (%p74) target = $region37
    $region36: #{tpu_custom_call.1} parent=1 // pred_region
      %77 = vst [vmem:[#allocation2] sm:$0xff] 0.0
      %78 = vst [vmem:[#allocation2 + $0x8] sm:$0xff] 0.0
      %79 = vst [vmem:[#allocation2 + $0x10] sm:$0xff] 0.0
      %80 = vst [vmem:[#allocation2 + $0x18] sm:$0xff] 0.0
    $region37: #{tpu_custom_call.1} parent=1 // pred_fallthru
      _
    %v81 = vld [vmem:[#allocation2] sm:$0xff]
    %v82 = vld [vmem:[#allocation2 + $0x8] sm:$0xff]
    %v83 = vld [vmem:[#allocation2 + $0x10] sm:$0xff]
    %v84 = vld [vmem:[#allocation2 + $0x18] sm:$0xff]
    %v85 = vld [vmem:[#allocation3] sm:$0xff]
    %v86 = vld [vmem:[#allocation3 + $0x8] sm:$0xff]
    %v87 = vld [vmem:[#allocation3 + $0x10] sm:$0xff]
    %v88 = vld [vmem:[#allocation3 + $0x18] sm:$0xff]
    %v89 = vld [vmem:[#allocation6] sm:$0xff]
    %v90 = vld [vmem:[#allocation6 + $0x8] sm:$0xff]
    %v91 = vld [vmem:[#allocation6 + $0x10] sm:$0xff]
    %v92 = vld [vmem:[#allocation6 + $0x18] sm:$0xff]
    %v93 = vsub.f32 %v85, %v89
    %v94 = vsub.f32 %v86, %v90
    %v95 = vsub.f32 %v87, %v91
    %v96 = vsub.f32 %v88, %v92
    %v97 = vand.u32 2147483647, %v93
    %v98 = vand.u32 2147483647, %v94
    %v99 = vand.u32 2147483647, %v95
    %v100 = vand.u32 2147483647, %v96
    %v101 = vmul.f32 %v97, 40.0
    %v102 = vmul.f32 %v98, 40.0
    %v103 = vmul.f32 %v99, 40.0
    %v104 = vmul.f32 %v100, 40.0
    %v105 = vld [vmem:[#allocation8] sm:$0xff]
    %v106 = vld [vmem:[#allocation8 + $0x8] sm:$0xff]
    %v107 = vld [vmem:[#allocation8 + $0x10] sm:$0xff]
    %v108 = vld [vmem:[#allocation8 + $0x18] sm:$0xff]
    %v109 = vld [vmem:[#allocation9] sm:$0xff]
    %v110 = vld [vmem:[#allocation9 + $0x8] sm:$0xff]
    %v111 = vld [vmem:[#allocation9 + $0x10] sm:$0xff]
    %v112 = vld [vmem:[#allocation9 + $0x18] sm:$0xff]
    %v113 = vsub.f32 %v105, %v109
    %v114 = vsub.f32 %v106, %v110
    %v115 = vsub.f32 %v107, %v111
    %v116 = vsub.f32 %v108, %v112
    %v117 = vand.u32 2147483647, %v113
    %v118 = vand.u32 2147483647, %v114
    %v119 = vand.u32 2147483647, %v115
    %v120 = vand.u32 2147483647, %v116
    %v121 = vmul.f32 %v117, 10.0
    %v122 = vmul.f32 %v118, 10.0
    %v123 = vmul.f32 %v119, 10.0
    %v124 = vmul.f32 %v120, 10.0
    %v125 = vadd.f32 %v101, %v121
    %v126 = vadd.f32 %v102, %v122
    %v127 = vadd.f32 %v103, %v123
    %v128 = vadd.f32 %v104, %v124
    %v129 = vadd.f32 %v81, %v125
    %v130 = vadd.f32 %v82, %v126
    %v131 = vadd.f32 %v83, %v127
    %v132 = vadd.f32 %v84, %v128
    %133 = vst [vmem:[#allocation2] sm:$0xff] %v129
    %134 = vst [vmem:[#allocation2 + $0x8] sm:$0xff] %v130
    %135 = vst [vmem:[#allocation2 + $0x10] sm:$0xff] %v131
    %136 = vst [vmem:[#allocation2 + $0x18] sm:$0xff] %v132
    // Predicated region
    $region38: #{tpu_custom_call.1} parent=1 // pred_check
      %p137 = pneg %p73
    $region39: #{tpu_custom_call.1} parent=1 // pred_check_branch
      %139 = sbr.rel (%p137) target = $region41
    $region40: #{tpu_custom_call.1} parent=1 // pred_region
      %v140 = vld [vmem:[#allocation2] sm:$0xff]
      %v141 = vld [vmem:[#allocation2 + $0x8] sm:$0xff]
      %v142 = vld [vmem:[#allocation2 + $0x10] sm:$0xff]
      %v143 = vld [vmem:[#allocation2 + $0x18] sm:$0xff]
      %v144 = vadd.f32 %v140, %v141
      %v145 = vadd.f32 %v144, %v142
      %v146 = vadd.f32 %v145, %v143
      %147 = vadd.xlane.f32.xlu0 %v146
      %v148 = vpop.xlane.xlu0 %147
      %v149 = vrot.slane %v148, 4
      %v150 = vadd.f32 %v148, %v149
      %v151 = vrot.slane %v150, 2
      %v152 = vadd.f32 %v150, %v151
      %v153 = vrot.slane %v152, 1
      %v154 = vadd.f32 %v152, %v153
      %s155 = vtos %v154
      %v156 = vstv %s155
      %vm157 = vcmask 0
      %158 = vst.msk [vmem:[#allocation11] sm:$0x1] %vm157, %v156
    $region41: #{tpu_custom_call.1} parent=1 // pred_fallthru
      _
    // Predicated region
    $region42: #{tpu_custom_call.1} parent=1 // pred_check
      _
    $region43: #{tpu_custom_call.1} parent=1 // pred_check_branch
      %160 = sbr.rel (0) target = $region45
    $region44: #{tpu_custom_call.1} parent=1 // pred_region
      %162 = vsyncadd [#allocation5], 0
      %s164 = sshll.u32 [#allocation11], 4
      %s165 = int_to_ptr.vmem [resolvable:$true] %s164
      %s166 = sshll.u32 %s4, 4
      %s167 = int_to_ptr.hbm [resolvable:$true] %s166
      %169 = dma.vmem_to_hbm [thread:$0]  %s165, 16, %s167, [#allocation5]
    $region45: #{tpu_custom_call.1} parent=1 // pred_fallthru
      _
    // Predicated region
    $region46: #{tpu_custom_call.1} parent=1 // pred_check
      _
    $region47: #{tpu_custom_call.1} parent=1 // pred_check_branch
      %171 = sbr.rel (0) target = $region49
    $region48: #{tpu_custom_call.1} parent=1 // pred_region
      %173 = dma.done [#allocation5], 16
    $region49: #{tpu_custom_call.1} parent=1 // pred_fallthru
      _
    %174 = vsyncpa [#allocation4], 1
    %175 = vsyncpa [#allocation7], 1
    %176 = vsyncpa [#allocation10], 1
    %177 = vsyncpa [#allocation5], 1

</llo_original>
